<compile_context>
chip_gen: v5e
topology: v5e:2x2
jax: 0.10.0
libtpu: 0.0.40
codegen_flags: <defaults>
</compile_context>

<pallas_src>
from functools import partial

import jax
import jax.numpy as jnp
from jax.experimental import pallas as pl
from jax.experimental.pallas import tpu as pltpu


def _acos_poly(x):
    """acos(x) via Abramowitz & Stegun 4.4.46 (|err| <= 2e-8 rad).

    Uses only sqrt / mul / add / select so it lowers on Mosaic (no native
    acos needed).  |x| is clamped to 1, so values that round marginally past
    1.0 give ~0 / pi instead of NaN (intentional small deviation from
    torch.acos' NaN behaviour on out-of-domain inputs).
    """
    f32 = jnp.float32
    a = jnp.minimum(jnp.abs(x), f32(1.0))
    p = f32(-0.0012624911)
    p = p * a + f32(0.0066700901)
    p = p * a + f32(-0.0170881256)
    p = p * a + f32(0.0308918810)
    p = p * a + f32(-0.0501743046)
    p = p * a + f32(0.0889789874)
    p = p * a + f32(-0.2145988016)
    p = p * a + f32(1.5707963050)
    r = jnp.sqrt(f32(1.0) - a) * p
    return jnp.where(x < 0, f32(3.14159265358979) - r, r)


def _sam_kernel(y_ref, gt_ref, out_ref, *, total_rows):
    # y_ref/gt_ref: (1, C, TR, 128); out_ref: (1, 1, 8, 128) partial sums.
    _, C, TR, L = y_ref.shape
    f32 = jnp.float32

    num = jnp.zeros((TR, L), f32)
    ysq = jnp.zeros((TR, L), f32)
    gsq = jnp.zeros((TR, L), f32)
    # Per-channel accumulation (static unroll over the small channel axis):
    # upcasts one (TR,128) slab at a time so no full-tile f32 copies of y/gt
    # ever live in VMEM, and the channel reduction stays pure VPU adds.
    for c in range(C):
        yc = y_ref[0, c].astype(f32)
        gc = gt_ref[0, c].astype(f32)
        num = num + yc * gc
        ysq = ysq + yc * yc
        gsq = gsq + gc * gc

    denom = jnp.sqrt(ysq) * jnp.sqrt(gsq) + f32(1e-5)
    # Full-precision reciprocal (approx=True would perturb sam enough to
    # matter under arccos near |sam| ~ 1).
    sam = num * pl.reciprocal(denom, approx=False)
    ang = _acos_poly(sam)

    # Mask rows past the end of the image (partial last tile of a cdiv grid).
    if total_rows % TR != 0:
        j = pl.program_id(1)
        valid = total_rows - j * TR
        row_idx = jax.lax.broadcasted_iota(jnp.int32, (TR, L), 0)
        ang = jnp.where(row_idx < valid, ang, f32(0.0))

    # Fold the (TR,128) angles into a single (8,128) partial-sum vreg (pure
    # VPU adds): only 4 KiB is written back per grid step instead of TR*512 B.
    if TR % 8 == 0:
        folded = ang.reshape(TR // 8, 8, L).sum(axis=0)
    else:  # TR == total_rows < 8: park the column sums in sublane 0.
        col = jnp.sum(ang, axis=0, keepdims=True)               # (1, 128)
        sub = jax.lax.broadcasted_iota(jnp.int32, (8, L), 0)
        folded = jnp.where(sub == 0, jnp.broadcast_to(col, (8, L)), f32(0.0))
    out_ref[0, 0] = folded


def _vmem_budgets():
    """(tile budget, scoped vmem limit): conservative (v7x-safe) defaults,
    scaled up only when the runtime reports a 128 MiB-VMEM chip (v5e/v6e)."""
    budget, limit = 14 * 2**20, 32 * 2**20
    try:
        cap = int(getattr(pltpu.get_tpu_info(), "vmem_capacity_bytes", 0))
        if cap >= 100 * 2**20:          # v5e / v6e: 128 MiB physical VMEM
            budget, limit = 48 * 2**20, 96 * 2**20
    except Exception:
        pass
    return budget, limit


def _num_tensorcores():
    """Best-effort TC count.  Default to 2 (conservative for v7x; the cost of
    forcing a 2-way grid split on single-TC chips is one ~0.35 us step)."""
    try:
        info = pltpu.get_tpu_info()
        for name in ("num_cores", "num_tensorcores", "tensorcore_count",
                     "cores_per_chip", "num_tensor_cores"):
            v = getattr(info, name, None)
            if isinstance(v, int) and v > 0:
                return v
    except Exception:
        pass
    return 2


def _pick_tile_rows(rows, C, in_itemsize, vmem_budget_bytes, align):
    """Largest align-multiple tile-row count whose live VMEM fits the budget.

    Live VMEM per row-of-128 pixels:
      2 inputs * 2 pipeline buffers * C * 128 * itemsize     (input blocks)
      + ~6 f32 rows of 128 (3 accumulators + transient per-channel upcasts)
    The (8,128) f32 output block (2 buffers, 8 KiB total) is constant noise.
    """
    if rows <= align:
        return rows                      # block == full dim: always legal
    bytes_per_row = 4 * C * 128 * in_itemsize + 6 * 128 * 4
    max_tr = max(align, (vmem_budget_bytes // bytes_per_row) // align * align)
    rows_floor = (rows // align) * align
    return max(align, min(max_tr, rows_floor))


def sam_loss(y, gt):
    """SAM loss matching PyTorch SAMLoss.forward. y, gt: (B,C,H,W) f32/bf16."""
    B, C, H, W = y.shape
    assert gt.shape == y.shape
    N = H * W
    assert N % 128 == 0, "H*W must be a multiple of 128 (TPU lane width)"
    rows = N // 128

    itemsize = jnp.dtype(y.dtype).itemsize
    align = 16 if itemsize == 2 else 8          # bf16 packs 16 sublanes/vreg
    budget, vmem_limit = _vmem_budgets()
    tr = _pick_tile_rows(rows, C, itemsize, budget, align)
    grid_j = pl.cdiv(rows, tr)

    # v7x: one TC can only drive ~half the chip's HBM BW, so keep >= 2
    # parallel grid steps whenever possible (near-free on single-TC chips).
    if _num_tensorcores() >= 2:
        while B * grid_j < 2 and tr > align:
            tr = max(align, ((tr // 2 + align - 1) // align) * align)
            grid_j = pl.cdiv(rows, tr)

    y4 = y.reshape(B, C, rows, 128)
    g4 = gt.reshape(B, C, rows, 128)

    cost = pl.CostEstimate(
        flops=int(B * N * (6 * C + 40)),
        transcendentals=int(B * N * 4),
        bytes_accessed=int(2 * B * C * N * itemsize + B * grid_j * 8 * 128 * 4),
    )

    partial_sums = pl.pallas_call(
        partial(_sam_kernel, total_rows=rows),
        out_shape=jax.ShapeDtypeStruct((B, grid_j, 8, 128), jnp.float32),
        grid_spec=pltpu.PrefetchScalarGridSpec(
            num_scalar_prefetch=0,
            grid=(B, grid_j),
            in_specs=[
                pl.BlockSpec((1, C, tr, 128), lambda b, j: (b, 0, j, 0)),
                pl.BlockSpec((1, C, tr, 128), lambda b, j: (b, 0, j, 0)),
            ],
            out_specs=pl.BlockSpec((1, 1, 8, 128), lambda b, j: (b, j, 0, 0)),
        ),
        compiler_params=pltpu.CompilerParams(
            dimension_semantics=("parallel", "parallel"),
            vmem_limit_bytes=vmem_limit,
        ),
        cost_estimate=cost,
    )(y4, g4)

    # Tiny epilogue: sum B*grid_j*1024 partials; constants match torch exactly.
    return jnp.sum(partial_sums) / (B * H * W) * 180.0 / 3.14159


def sam_loss_ref(y, gt):
    """Pure-JAX reference mirroring the PyTorch code exactly."""
    B, C, H, W = y.shape
    y_flat = y.reshape(B, C, -1).astype(jnp.float32)
    gt_flat = gt.reshape(B, C, -1).astype(jnp.float32)
    y_norm = jnp.linalg.norm(y_flat, ord=2, axis=1)
    gt_norm = jnp.linalg.norm(gt_flat, ord=2, axis=1)
    numerator = jnp.sum(gt_flat * y_flat, axis=1)
    denominator = y_norm * gt_norm
    sam = numerator / (denominator + 1e-5)
    return jnp.sum(jnp.arccos(sam)) / (B * H * W) * 180.0 / 3.14159


if __name__ == "__main__":
    key = jax.random.PRNGKey(0)
    k1, k2 = jax.random.split(key)

    B, C, H, W = 2, 4, 16, 16
    # Positive-ish inputs keep cos angles well inside (-1, 1).
    y = jax.random.uniform(k1, (B, C, H, W), dtype=jnp.float32, minval=0.1, maxval=1.0)
    gt = jax.random.uniform(k2, (B, C, H, W), dtype=jnp.float32, minval=0.1, maxval=1.0)

    out = jax.block_until_ready(sam_loss(y, gt))
    ref = jax.block_until_ready(sam_loss_ref(y, gt))
    assert jnp.allclose(out, ref, rtol=1e-4, atol=1e-4), (out, ref)

    # bf16 ingestion path (halves HBM read traffic on the mem-bound kernel).
    out_bf16 = jax.block_until_ready(sam_loss(y.astype(jnp.bfloat16),
                                              gt.astype(jnp.bfloat16)))
    ref_bf16 = jax.block_until_ready(sam_loss_ref(y.astype(jnp.bfloat16),
                                                  gt.astype(jnp.bfloat16)))
    assert jnp.allclose(out_bf16, ref_bf16, rtol=5e-2, atol=5e-2), (out_bf16, ref_bf16)

    print("KERNEL_OK")
</pallas_src>

<mosaic_0001>
module attributes {stable_mosaic.version = 11 : i64} {
  func.func @_sam_kernel(%arg0: i32, %arg1: i32, %arg2: memref<1x4x2x128xf32, #tpu.memory_space<vmem>>, %arg3: memref<1x4x2x128xf32, #tpu.memory_space<vmem>>, %arg4: memref<1x1x8x128xf32, #tpu.memory_space<vmem>>) attributes {dimension_semantics = [#tpu.dimension_semantics<parallel>, #tpu.dimension_semantics<parallel>], iteration_bounds = array<i64: 2, 1>, scalar_prefetch = 0 : i64, scratch_operands = 0 : i64, tpu.core_type = #tpu.core_type<tc>, window_params = [{transform_indices = @transform_0, window_bounds = array<i64: 1, 4, 2, 128>}, {transform_indices = @transform_1, window_bounds = array<i64: 1, 4, 2, 128>}, {transform_indices = @transform_2, window_bounds = array<i64: 1, 1, 8, 128>}]} {
    %cst = arith.constant 0.000000e+00 : f32
    %0 = vector.broadcast %cst : f32 to vector<2x128xf32>
    %cst_0 = arith.constant 0.000000e+00 : f32
    %1 = vector.broadcast %cst_0 : f32 to vector<2x128xf32>
    %cst_1 = arith.constant 0.000000e+00 : f32
    %2 = vector.broadcast %cst_1 : f32 to vector<2x128xf32>
    %c0 = arith.constant 0 : index
    %c0_2 = arith.constant 0 : index
    %c0_3 = arith.constant 0 : index
    %c0_4 = arith.constant 0 : index
    %3 = vector.load %arg2[%c0, %c0_2, %c0_3, %c0_4] : memref<1x4x2x128xf32, #tpu.memory_space<vmem>>, vector<1x1x2x128xf32>
    %4 = vector.shape_cast %3 : vector<1x1x2x128xf32> to vector<2x128xf32>
    %c0_5 = arith.constant 0 : index
    %c0_6 = arith.constant 0 : index
    %c0_7 = arith.constant 0 : index
    %c0_8 = arith.constant 0 : index
    %5 = vector.load %arg3[%c0_5, %c0_6, %c0_7, %c0_8] : memref<1x4x2x128xf32, #tpu.memory_space<vmem>>, vector<1x1x2x128xf32>
    %6 = vector.shape_cast %5 : vector<1x1x2x128xf32> to vector<2x128xf32>
    %7 = arith.mulf %4, %6 : vector<2x128xf32>
    %8 = arith.addf %0, %7 : vector<2x128xf32>
    %9 = arith.mulf %4, %4 : vector<2x128xf32>
    %10 = arith.addf %1, %9 : vector<2x128xf32>
    %11 = arith.mulf %6, %6 : vector<2x128xf32>
    %12 = arith.addf %2, %11 : vector<2x128xf32>
    %c0_9 = arith.constant 0 : index
    %c1 = arith.constant 1 : index
    %c0_10 = arith.constant 0 : index
    %c0_11 = arith.constant 0 : index
    %13 = vector.load %arg2[%c0_9, %c1, %c0_10, %c0_11] : memref<1x4x2x128xf32, #tpu.memory_space<vmem>>, vector<1x1x2x128xf32>
    %14 = vector.shape_cast %13 : vector<1x1x2x128xf32> to vector<2x128xf32>
    %c0_12 = arith.constant 0 : index
    %c1_13 = arith.constant 1 : index
    %c0_14 = arith.constant 0 : index
    %c0_15 = arith.constant 0 : index
    %15 = vector.load %arg3[%c0_12, %c1_13, %c0_14, %c0_15] : memref<1x4x2x128xf32, #tpu.memory_space<vmem>>, vector<1x1x2x128xf32>
    %16 = vector.shape_cast %15 : vector<1x1x2x128xf32> to vector<2x128xf32>
    %17 = arith.mulf %14, %16 : vector<2x128xf32>
    %18 = arith.addf %8, %17 : vector<2x128xf32>
    %19 = arith.mulf %14, %14 : vector<2x128xf32>
    %20 = arith.addf %10, %19 : vector<2x128xf32>
    %21 = arith.mulf %16, %16 : vector<2x128xf32>
    %22 = arith.addf %12, %21 : vector<2x128xf32>
    %c0_16 = arith.constant 0 : index
    %c2 = arith.constant 2 : index
    %c0_17 = arith.constant 0 : index
    %c0_18 = arith.constant 0 : index
    %23 = vector.load %arg2[%c0_16, %c2, %c0_17, %c0_18] : memref<1x4x2x128xf32, #tpu.memory_space<vmem>>, vector<1x1x2x128xf32>
    %24 = vector.shape_cast %23 : vector<1x1x2x128xf32> to vector<2x128xf32>
    %c0_19 = arith.constant 0 : index
    %c2_20 = arith.constant 2 : index
    %c0_21 = arith.constant 0 : index
    %c0_22 = arith.constant 0 : index
    %25 = vector.load %arg3[%c0_19, %c2_20, %c0_21, %c0_22] : memref<1x4x2x128xf32, #tpu.memory_space<vmem>>, vector<1x1x2x128xf32>
    %26 = vector.shape_cast %25 : vector<1x1x2x128xf32> to vector<2x128xf32>
    %27 = arith.mulf %24, %26 : vector<2x128xf32>
    %28 = arith.addf %18, %27 : vector<2x128xf32>
    %29 = arith.mulf %24, %24 : vector<2x128xf32>
    %30 = arith.addf %20, %29 : vector<2x128xf32>
    %31 = arith.mulf %26, %26 : vector<2x128xf32>
    %32 = arith.addf %22, %31 : vector<2x128xf32>
    %c0_23 = arith.constant 0 : index
    %c3 = arith.constant 3 : index
    %c0_24 = arith.constant 0 : index
    %c0_25 = arith.constant 0 : index
    %33 = vector.load %arg2[%c0_23, %c3, %c0_24, %c0_25] : memref<1x4x2x128xf32, #tpu.memory_space<vmem>>, vector<1x1x2x128xf32>
    %34 = vector.shape_cast %33 : vector<1x1x2x128xf32> to vector<2x128xf32>
    %c0_26 = arith.constant 0 : index
    %c3_27 = arith.constant 3 : index
    %c0_28 = arith.constant 0 : index
    %c0_29 = arith.constant 0 : index
    %35 = vector.load %arg3[%c0_26, %c3_27, %c0_28, %c0_29] : memref<1x4x2x128xf32, #tpu.memory_space<vmem>>, vector<1x1x2x128xf32>
    %36 = vector.shape_cast %35 : vector<1x1x2x128xf32> to vector<2x128xf32>
    %37 = arith.mulf %34, %36 : vector<2x128xf32>
    %38 = arith.addf %28, %37 : vector<2x128xf32>
    %39 = arith.mulf %34, %34 : vector<2x128xf32>
    %40 = arith.addf %30, %39 : vector<2x128xf32>
    %41 = arith.mulf %36, %36 : vector<2x128xf32>
    %42 = arith.addf %32, %41 : vector<2x128xf32>
    %43 = math.sqrt %40 : vector<2x128xf32>
    %44 = math.sqrt %42 : vector<2x128xf32>
    %45 = arith.mulf %43, %44 : vector<2x128xf32>
    %cst_30 = arith.constant 9.99999974E-6 : f32
    %46 = vector.broadcast %cst_30 : f32 to vector<2x128xf32>
    %47 = arith.addf %45, %46 : vector<2x128xf32>
    %48 = tpu.reciprocal %47 : vector<2x128xf32> -> vector<2x128xf32>
    %49 = arith.mulf %38, %48 : vector<2x128xf32>
    %50 = math.absf %49 : vector<2x128xf32>
    %cst_31 = arith.constant 1.000000e+00 : f32
    %51 = vector.broadcast %cst_31 : f32 to vector<2x128xf32>
    %52 = arith.minimumf %50, %51 : vector<2x128xf32>
    %cst_32 = arith.constant -0.0012624911 : f32
    %53 = vector.broadcast %cst_32 : f32 to vector<2x128xf32>
    %54 = arith.mulf %53, %52 : vector<2x128xf32>
    %cst_33 = arith.constant 6.670090e-03 : f32
    %55 = vector.broadcast %cst_33 : f32 to vector<2x128xf32>
    %56 = arith.addf %54, %55 : vector<2x128xf32>
    %57 = arith.mulf %56, %52 : vector<2x128xf32>
    %cst_34 = arith.constant -0.0170881264 : f32
    %58 = vector.broadcast %cst_34 : f32 to vector<2x128xf32>
    %59 = arith.addf %57, %58 : vector<2x128xf32>
    %60 = arith.mulf %59, %52 : vector<2x128xf32>
    %cst_35 = arith.constant 0.0308918804 : f32
    %61 = vector.broadcast %cst_35 : f32 to vector<2x128xf32>
    %62 = arith.addf %60, %61 : vector<2x128xf32>
    %63 = arith.mulf %62, %52 : vector<2x128xf32>
    %cst_36 = arith.constant -0.0501743034 : f32
    %64 = vector.broadcast %cst_36 : f32 to vector<2x128xf32>
    %65 = arith.addf %63, %64 : vector<2x128xf32>
    %66 = arith.mulf %65, %52 : vector<2x128xf32>
    %cst_37 = arith.constant 0.0889789909 : f32
    %67 = vector.broadcast %cst_37 : f32 to vector<2x128xf32>
    %68 = arith.addf %66, %67 : vector<2x128xf32>
    %69 = arith.mulf %68, %52 : vector<2x128xf32>
    %cst_38 = arith.constant -0.214598805 : f32
    %70 = vector.broadcast %cst_38 : f32 to vector<2x128xf32>
    %71 = arith.addf %69, %70 : vector<2x128xf32>
    %72 = arith.mulf %71, %52 : vector<2x128xf32>
    %cst_39 = arith.constant 1.57079625 : f32
    %73 = vector.broadcast %cst_39 : f32 to vector<2x128xf32>
    %74 = arith.addf %72, %73 : vector<2x128xf32>
    %cst_40 = arith.constant 1.000000e+00 : f32
    %75 = vector.broadcast %cst_40 : f32 to vector<2x128xf32>
    %76 = arith.subf %75, %52 : vector<2x128xf32>
    %77 = math.sqrt %76 : vector<2x128xf32>
    %78 = arith.mulf %77, %74 : vector<2x128xf32>
    %cst_41 = arith.constant 0.000000e+00 : f32
    %79 = vector.broadcast %cst_41 : f32 to vector<2x128xf32>
    %80 = arith.cmpf olt, %49, %79 : vector<2x128xf32>
    %cst_42 = arith.constant 3.14159274 : f32
    %81 = vector.broadcast %cst_42 : f32 to vector<2x128xf32>
    %82 = arith.subf %81, %78 : vector<2x128xf32>
    %83 = arith.select %80, %82, %78 : vector<2x128xi1>, vector<2x128xf32>
    %cst_43 = arith.constant dense<0.000000e+00> : vector<128xf32>
    %84 = vector.multi_reduction <add>, %83, %cst_43 [0] : vector<2x128xf32> to vector<128xf32>
    %85 = vector.shape_cast %84 : vector<128xf32> to vector<1x128xf32>
    %86 = tpu.iota {dimensions = array<i32: 0>} : vector<8x128xi32>
    %c0_i32 = arith.constant 0 : i32
    %87 = vector.broadcast %c0_i32 : i32 to vector<8x128xi32>
    %88 = arith.cmpi eq, %86, %87 : vector<8x128xi32>
    %89 = vector.shape_cast %85 : vector<1x128xf32> to vector<1x128xf32>
    %90 = vector.broadcast %89 : vector<1x128xf32> to vector<8x128xf32>
    %cst_44 = arith.constant 0.000000e+00 : f32
    %91 = vector.broadcast %cst_44 : f32 to vector<8x128xf32>
    %92 = arith.select %88, %90, %91 : vector<8x128xi1>, vector<8x128xf32>
    %c0_45 = arith.constant 0 : index
    %c0_46 = arith.constant 0 : index
    %c0_47 = arith.constant 0 : index
    %c0_48 = arith.constant 0 : index
    %93 = vector.load %arg4[%c0_45, %c0_46, %c0_47, %c0_48] : memref<1x1x8x128xf32, #tpu.memory_space<vmem>>, vector<1x1x8x128xf32>
    %94 = vector.shape_cast %93 : vector<1x1x8x128xf32> to vector<8x128xf32>
    %95 = vector.shape_cast %92 : vector<8x128xf32> to vector<1x1x8x128xf32>
    tpu.vector_store %arg4[%c0_45, %c0_46, %c0_47, %c0_48], %95 {strides = array<i32>} : memref<1x1x8x128xf32, #tpu.memory_space<vmem>>, vector<1x1x8x128xf32>,
    return
  }
  func.func @transform_0(%arg0: i32, %arg1: i32) -> (i32, i32, i32, i32) {
    %c0_i32 = arith.constant 0 : i32
    %c0_i32_0 = arith.constant 0 : i32
    %c0_i32_1 = arith.constant 0 : i32
    return %arg0, %c0_i32, %arg1, %c0_i32_0 : i32, i32, i32, i32
  }
  func.func @transform_1(%arg0: i32, %arg1: i32) -> (i32, i32, i32, i32) {
    %c0_i32 = arith.constant 0 : i32
    %c0_i32_0 = arith.constant 0 : i32
    %c0_i32_1 = arith.constant 0 : i32
    return %arg0, %c0_i32, %arg1, %c0_i32_0 : i32, i32, i32, i32
  }
  func.func @transform_2(%arg0: i32, %arg1: i32) -> (i32, i32, i32, i32) {
    %c0_i32 = arith.constant 0 : i32
    %c0_i32_0 = arith.constant 0 : i32
    %c0_i32_1 = arith.constant 0 : i32
    return %arg0, %arg1, %c0_i32, %c0_i32_0 : i32, i32, i32, i32
  }
}

</mosaic_0001>

<llo_original>
// kernel: tpu_custom_call.1
$region0: #{tpu_custom_call.1}
  #allocation0 [shape = 'u32[]', space=smem, size = 0x4, offset = 0x4, fixed_abs, tag = 'smem constant byte address 0x4 - core index']
  #allocation1 [shape = 'u32[72,128]{1,0:T(1,128)}', space=vmem, size = 0x9000, scoped, tag = 'internal scratch']
  %s0 = inlined_call_operand.hbm [shape: f32[2,4,2,128], index: 0, kind: input, shape index: {}]
  %s1 = inlined_call_operand.hbm [shape: f32[2,4,2,128], index: 1, kind: input, shape index: {}]
  %s2 = inlined_call_operand.hbm [shape: f32[2,1,8,128], index: 2, kind: output, shape index: {}]
  %s3 = sld [smem:[#allocation0]]
  $region49: #{tpu_custom_call.1} parent=0
    _
  %s5 = ssub.s32 1, %s3
  %s6 = scalar_select 0, %s5, %s3
  $region1: #{tpu_custom_call.1} parent=0
    #allocation2 [shape = 'u8[8192]{0}', space=vmem, size = 0x2000, scoped, tag = 'input window, operand 0']
    #allocation3 [shape = 's32[2]{0}', space=sflag, size = 0x8, scoped, tag = 'scoped memory for tpu_custom_call.1']
    #allocation4 [shape = 's32[2]{0}', space=sflag, size = 0x8, scoped, tag = 'scoped memory for tpu_custom_call.1']
    #allocation5 [shape = 'u8[8192]{0}', space=vmem, size = 0x2000, scoped, tag = 'input window, operand 1']
    #allocation6 [shape = 's32[2]{0}', space=sflag, size = 0x8, scoped, tag = 'scoped memory for tpu_custom_call.1']
    #allocation7 [shape = 'u8[8192]{0}', space=vmem, size = 0x2000, scoped, tag = 'output window, operand 0']
    %7 = vsyncpa [#allocation3], 0
    %s8 = scalar_lea.sflag [#allocation3], 1
    %9 = vsyncpa %s8, 0
    %10 = vsyncpa [#allocation6], 0
    %s11 = scalar_lea.sflag [#allocation6], 1
    %12 = vsyncpa %s11, 0
    %13 = vsyncpa [#allocation4], 0
    %s14 = scalar_lea.sflag [#allocation4], 1
    %15 = vsyncpa %s14, 0
    loop: start=0, step=1, limit=4
    $region2: #{tpu_custom_call.1} parent=1 // loop_pre_header
      _
    $region3: #{tpu_custom_call.1} parent=1 // loop_header
      %s17 = sphi 0, %s21
      %p18 = scmp.ge.s32.totalorder %s17, 4
      %s24 = sphi 0, %s36
      %s25 = sphi 0, %s32
      %s26 = sphi 0, %s24
      %s27 = sphi 0, %s25
      %s28 = sphi 0, %s26
      %s29 = sphi 0, %s27
      %s41 = sphi 0, %s43
      %s44 = sphi 0, %s41
      %s45 = sphi 0, %s44
      %s61 = sphi 0, %s45
      %s69 = sphi 0, %s71
      %s72 = sphi 0, %s69
      %s73 = sphi 0, %s72
      %s89 = sphi 0, %s73
      %s97 = sphi 0, %s99
      %s100 = sphi 0, %s97
      %s101 = sphi 0, %s100
      %s117 = sphi 0, %s101
    $region4: #{tpu_custom_call.1} parent=1 // loop_header_branch
      %20 = sbr.rel (%p18) target = $region8
    $region5: #{tpu_custom_call.1} parent=1 // loop_body
      %s22 = ssub.s32 %s17, 1
      %s23 = ssub.s32 %s17, 2
      %s30 = sadd.s32 1, %s25
      %p31 = scmp.ge.s32.totalorder %s30, 1
      %s32 = scalar_select %p31, 0, %s30
      %s33 = sadd.s32 1, %s24
      %s34 = scalar_select %p31, %s33, %s24
      %p35 = scmp.ge.s32.totalorder %s34, 2
      %s36 = scalar_select %p35, 0, %s34
      %s37 = ssub.s32 %s24, %s36
      %s38 = ssub.s32 %s25, %s32
      %s39 = sor.u32 %s37, %s38
      %p40 = scmp.eq.s32.totalorder %s39, 0
      %s42 = sadd.s32 %s41, 1
      %s43 = scalar_select %p40, %s41, %s42
      %p46 = pneg %p40
      %p47 = scmp.eq.s32.totalorder %s17, 1
      %p48 = por %p46, %p47
      %p49 = scmp.ne.s32.totalorder %s41, %s44
      %p50 = scmp.eq.s32.totalorder %s17, 0
      %p51 = por %p49, %p50
      %p52 = scmp.ne.s32.totalorder %s41, %s44
      %p53 = scmp.eq.s32.totalorder %s22, 1
      %p54 = por %p52, %p53
      %p55 = scmp.ne.s32.totalorder %s44, %s45
      %p56 = scmp.eq.s32.totalorder %s22, 0
      %p57 = por %p55, %p56
      %p58 = scmp.ne.s32.totalorder %s44, %s45
      %p59 = scmp.eq.s32.totalorder %s23, 1
      %p60 = por %p58, %p59
      %p62 = scmp.ne.s32.totalorder %s45, %s61
      %p63 = scmp.eq.s32.totalorder %s23, 0
      %p64 = por %p62, %p63
      %s65 = ssub.s32 %s24, %s36
      %s66 = ssub.s32 %s25, %s32
      %s67 = sor.u32 %s65, %s66
      %p68 = scmp.eq.s32.totalorder %s67, 0
      %s70 = sadd.s32 %s69, 1
      %s71 = scalar_select %p68, %s69, %s70
      %p74 = pneg %p68
      %p75 = scmp.eq.s32.totalorder %s17, 1
      %p76 = por %p74, %p75
      %p77 = scmp.ne.s32.totalorder %s69, %s72
      %p78 = scmp.eq.s32.totalorder %s17, 0
      %p79 = por %p77, %p78
      %p80 = scmp.ne.s32.totalorder %s69, %s72
      %p81 = scmp.eq.s32.totalorder %s22, 1
      %p82 = por %p80, %p81
      %p83 = scmp.ne.s32.totalorder %s72, %s73
      %p84 = scmp.eq.s32.totalorder %s22, 0
      %p85 = por %p83, %p84
      %p86 = scmp.ne.s32.totalorder %s72, %s73
      %p87 = scmp.eq.s32.totalorder %s23, 1
      %p88 = por %p86, %p87
      %p90 = scmp.ne.s32.totalorder %s73, %s89
      %p91 = scmp.eq.s32.totalorder %s23, 0
      %p92 = por %p90, %p91
      %s93 = ssub.s32 %s24, %s36
      %s94 = ssub.s32 %s25, %s32
      %s95 = sor.u32 %s93, %s94
      %p96 = scmp.eq.s32.totalorder %s95, 0
      %s98 = sadd.s32 %s97, 1
      %s99 = scalar_select %p96, %s97, %s98
      %p102 = pneg %p96
      %p103 = scmp.eq.s32.totalorder %s17, 1
      %p104 = por %p102, %p103
      %p105 = scmp.ne.s32.totalorder %s97, %s100
      %p106 = scmp.eq.s32.totalorder %s17, 0
      %p107 = por %p105, %p106
      %p108 = scmp.ne.s32.totalorder %s97, %s100
      %p109 = scmp.eq.s32.totalorder %s22, 1
      %p110 = por %p108, %p109
      %p111 = scmp.ne.s32.totalorder %s100, %s101
      %p112 = scmp.eq.s32.totalorder %s22, 0
      %p113 = por %p111, %p112
      %p114 = scmp.ne.s32.totalorder %s100, %s101
      %p115 = scmp.eq.s32.totalorder %s23, 1
      %p116 = por %p114, %p115
      %p118 = scmp.ne.s32.totalorder %s101, %s117
      %p119 = scmp.eq.s32.totalorder %s23, 0
      %p120 = por %p118, %p119
      %p121 = scmp.le.s32.totalorder 1, %s17
      %p122 = scmp.lt.s32.totalorder %s17, 3
      %p123 = pnand %p121, %p122
      %p124 = pneg %p123
      // Predicated region
      $region9: #{tpu_custom_call.1} parent=5 // pred_check
        _
      $region10: #{tpu_custom_call.1} parent=5 // pred_check_branch
        %126 = sbr.rel (%p123) target = $region12
      $region11: #{tpu_custom_call.1} parent=5 // pred_region
        %s127 = ssub.s32 %s17, 1
      $region12: #{tpu_custom_call.1} parent=5 // pred_fallthru
        _
      %p128 = scmp.lt.s32.totalorder %s17, 2
      // Predicated region
      $region13: #{tpu_custom_call.1} parent=5 // pred_check
        %p129 = pneg %p128
      $region14: #{tpu_custom_call.1} parent=5 // pred_check_branch
        %131 = sbr.rel (%p129) target = $region16
      $region15: #{tpu_custom_call.1} parent=5 // pred_region
        // Predicated region
        $region17: #{tpu_custom_call.1} parent=15 // pred_check
          %p132 = pneg %p51
        $region18: #{tpu_custom_call.1} parent=15 // pred_check_branch
          %134 = sbr.rel (%p132) target = $region20
        $region19: #{tpu_custom_call.1} parent=15 // pred_region
          %s135 = sand.u32 %s41, 1
          %s136 = scalar_lea.sflag [#allocation3], %s135
          %s137 = sand.u32 %s41, 1
          %s138 = smul.addr %s137, 8
          %s139 = scalar_lea.vmem [#allocation2], %s138
          %141 = vsyncadd %s136, 0
          %s142 = smul.addr %s24, 4
          %s143 = sadd.s32 %s25, %s142
          %s144 = smul.addr %s143, 2
          %s145 = scalar_lea.hbm %s0, %s144
          %s146 = sshll.u32 %s145, 4
          %s147 = int_to_ptr.hbm [resolvable:$true] %s146
          %s148 = sshll.u32 %s139, 4
          %s149 = int_to_ptr.vmem [resolvable:$true] %s148
          %154 = dma.hbm_to_vmem [thread:$0]  %s147, 128, %s149, %s136, 32, 32, 2
        $region20: #{tpu_custom_call.1} parent=15 // pred_fallthru
          _
        // Predicated region
        $region21: #{tpu_custom_call.1} parent=15 // pred_check
          %p155 = pneg %p79
        $region22: #{tpu_custom_call.1} parent=15 // pred_check_branch
          %157 = sbr.rel (%p155) target = $region24
        $region23: #{tpu_custom_call.1} parent=15 // pred_region
          %s158 = sand.u32 %s69, 1
          %s159 = scalar_lea.sflag [#allocation6], %s158
          %s160 = sand.u32 %s69, 1
          %s161 = smul.addr %s160, 8
          %s162 = scalar_lea.vmem [#allocation5], %s161
          %164 = vsyncadd %s159, 0
          %s165 = smul.addr %s24, 4
          %s166 = sadd.s32 %s25, %s165
          %s167 = smul.addr %s166, 2
          %s168 = scalar_lea.hbm %s1, %s167
          %s169 = sshll.u32 %s168, 4
          %s170 = int_to_ptr.hbm [resolvable:$true] %s169
          %s171 = sshll.u32 %s162, 4
          %s172 = int_to_ptr.vmem [resolvable:$true] %s171
          %177 = dma.hbm_to_vmem [thread:$0]  %s170, 128, %s172, %s159, 32, 32, 2
        $region24: #{tpu_custom_call.1} parent=15 // pred_fallthru
          _
      $region16: #{tpu_custom_call.1} parent=5 // pred_fallthru
        _
      %p178 = scmp.le.s32.totalorder 1, %s17
      %p179 = scmp.lt.s32.totalorder %s17, 3
      %p180 = pnand %p178, %p179
      %p181 = pneg %p180
      // Predicated region
      $region25: #{tpu_custom_call.1} parent=5 // pred_check
        _
      $region26: #{tpu_custom_call.1} parent=5 // pred_check_branch
        %183 = sbr.rel (%p180) target = $region28
      $region27: #{tpu_custom_call.1} parent=5 // pred_region
        %s184 = ssub.s32 %s17, 1
        %s185 = sand.u32 %s44, 1
        %s186 = scalar_lea.sflag [#allocation3], %s185
        %s187 = sand.u32 %s44, 1
        %s188 = smul.addr %s187, 8
        %s189 = scalar_lea.vmem [#allocation2], %s188
        // Predicated region
        $region29: #{tpu_custom_call.1} parent=27 // pred_check
          %p190 = pneg %p57
        $region30: #{tpu_custom_call.1} parent=27 // pred_check_branch
          %192 = sbr.rel (%p190) target = $region32
        $region31: #{tpu_custom_call.1} parent=27 // pred_region
          %194 = dma.done %s186, 128
        $region32: #{tpu_custom_call.1} parent=27 // pred_fallthru
          _
        %s195 = sand.u32 %s72, 1
        %s196 = scalar_lea.sflag [#allocation6], %s195
        %s197 = sand.u32 %s72, 1
        %s198 = smul.addr %s197, 8
        %s199 = scalar_lea.vmem [#allocation5], %s198
        // Predicated region
        $region33: #{tpu_custom_call.1} parent=27 // pred_check
          %p200 = pneg %p85
        $region34: #{tpu_custom_call.1} parent=27 // pred_check_branch
          %202 = sbr.rel (%p200) target = $region36
        $region35: #{tpu_custom_call.1} parent=27 // pred_region
          %204 = dma.done %s196, 128
        $region36: #{tpu_custom_call.1} parent=27 // pred_fallthru
          _
        %s205 = sand.u32 %s44, 1
        %s206 = scalar_lea.sflag [#allocation3], %s205
        %s207 = sand.u32 %s44, 1
        %s208 = smul.addr %s207, 8
        %s209 = scalar_lea.vmem [#allocation2], %s208
        %p210 = pneg %p57
        %p211 = pneg %p54
        %s212 = sand.u32 %s72, 1
        %s213 = scalar_lea.sflag [#allocation6], %s212
        %s214 = sand.u32 %s72, 1
        %s215 = smul.addr %s214, 8
        %s216 = scalar_lea.vmem [#allocation5], %s215
        %p217 = pneg %p85
        %p218 = pneg %p82
        %p219 = pneg %p113
        %p220 = pneg %p110
        %s221 = sand.u32 %s100, 1
        %s222 = scalar_lea.sflag [#allocation4], %s221
        %s223 = sand.u32 %s100, 1
        %s224 = smul.addr %s223, 8
        %s225 = scalar_lea.vmem [#allocation7], %s224
        %v226 = vld [vmem:[%s189] sm:$0x3]
        %v227 = vld [vmem:[%s199] sm:$0x3]
        %v228 = vmul.f32 %v226, %v227
        %v229 = vadd.f32 %v228, 0.0
        %v230 = vmul.f32 %v226, %v226
        %v231 = vadd.f32 %v230, 0.0
        %v232 = vmul.f32 %v227, %v227
        %v233 = vadd.f32 %v232, 0.0
        %s234 = scalar_lea.vmem %s189, 2 [#allocation2]
        %v235 = vld [vmem:[%s234] sm:$0x3]
        %s236 = scalar_lea.vmem %s199, 2 [#allocation5]
        %v237 = vld [vmem:[%s236] sm:$0x3]
        %v238 = vmul.f32 %v235, %v237
        %v239 = vadd.f32 %v229, %v238
        %v240 = vmul.f32 %v235, %v235
        %v241 = vadd.f32 %v231, %v240
        %v242 = vmul.f32 %v237, %v237
        %v243 = vadd.f32 %v233, %v242
        %s244 = scalar_lea.vmem %s189, 4 [#allocation2]
        %v245 = vld [vmem:[%s244] sm:$0x3]
        %s246 = scalar_lea.vmem %s199, 4 [#allocation5]
        %v247 = vld [vmem:[%s246] sm:$0x3]
        %v248 = vmul.f32 %v245, %v247
        %v249 = vadd.f32 %v239, %v248
        %v250 = vmul.f32 %v245, %v245
        %v251 = vadd.f32 %v241, %v250
        %v252 = vmul.f32 %v247, %v247
        %v253 = vadd.f32 %v243, %v252
        %s254 = scalar_lea.vmem %s189, 6 [#allocation2]
        %v255 = vld [vmem:[%s254] sm:$0x3]
        %s256 = scalar_lea.vmem %s199, 6 [#allocation5]
        %v257 = vld [vmem:[%s256] sm:$0x3]
        %v258 = vmul.f32 %v255, %v257
        %v259 = vadd.f32 %v249, %v258
        %v260 = vmul.f32 %v255, %v255
        %v261 = vadd.f32 %v251, %v260
        %v262 = vmul.f32 %v257, %v257
        %v263 = vadd.f32 %v253, %v262
        %v264 = vrsqrt.pop %v261
        %v265 = vmul.f32 %v264, %v261
        %v266 = vmul.f32 %v265, %v264
        %v267 = vmul.f32 0.5, %v266
        %v268 = vsub.f32 1.5, %v267
        %v269 = vmul.f32 %v264, %v268
        %v270 = vmul.f32 %v261, %v269
        %vm271 = vcmp.eq.f32.partialorder %v261, inf
        %v272 = vsel %vm271, %v261, %v270
        %vm273 = vcmp.eq.f32.partialorder %v261, 0.0
        %v274 = vand.u32 %v261, 2147483648
        %v275 = vsel %vm273, %v274, %v272
        %v276 = vrsqrt.pop %v263
        %v277 = vmul.f32 %v276, %v263
        %v278 = vmul.f32 %v277, %v276
        %v279 = vmul.f32 0.5, %v278
        %v280 = vsub.f32 1.5, %v279
        %v281 = vmul.f32 %v276, %v280
        %v282 = vmul.f32 %v263, %v281
        %vm283 = vcmp.eq.f32.partialorder %v263, inf
        %v284 = vsel %vm283, %v263, %v282
        %vm285 = vcmp.eq.f32.partialorder %v263, 0.0
        %v286 = vand.u32 %v263, 2147483648
        %v287 = vsel %vm285, %v286, %v284
        %v288 = vmul.f32 %v275, %v287
        %v289 = vadd.f32 %v288, 1e-05
        %v290 = vrcp.pop %v289
        %v291 = vmul.f32 %v289, %v290
        %v292 = vsub.f32 1.0, %v291
        %v293 = vmul.f32 %v290, %v292
        %v294 = vadd.f32 %v290, %v293
        %vm295 = vweird.f32 %v289
        %vm296 = vweird.f32 %v290
        %vm297 = vmor %vm295, %vm296
        %v298 = vsel %vm297, %v290, %v294
        %v299 = vand.u32 2147483647, %v289
        %vm300 = vcmp.eq.f32.partialorder %v299, 8.507059e+37
        %v301 = vand.u32 %v289, 2147483648
        %v302 = vor.u32 1.1754944e-38, %v301
        %v303 = vsel %vm300, %v302, %v298
        %v304 = vmul.f32 %v259, %v303
        %v305 = vand.u32 2147483647, %v304
        %v306 = vmin.f32 %v305, 1.0
        %v307 = vmul.f32 %v306, -0.0012624911
        %v308 = vadd.f32 %v307, 0.00667009
        %v309 = vmul.f32 %v308, %v306
        %v310 = vadd.f32 %v309, -0.017088126
        %v311 = vmul.f32 %v310, %v306
        %v312 = vadd.f32 %v311, 0.03089188
        %v313 = vmul.f32 %v312, %v306
        %v314 = vadd.f32 %v313, -0.050174303
        %v315 = vmul.f32 %v314, %v306
        %v316 = vadd.f32 %v315, 0.08897899
        %v317 = vmul.f32 %v316, %v306
        %v318 = vadd.f32 %v317, -0.2145988
        %v319 = vmul.f32 %v318, %v306
        %v320 = vadd.f32 %v319, 1.5707963
        %v321 = vsub.f32 1.0, %v306
        %v322 = vrsqrt.pop %v321
        %v323 = vmul.f32 %v322, %v321
        %v324 = vmul.f32 %v323, %v322
        %v325 = vmul.f32 0.5, %v324
        %v326 = vsub.f32 1.5, %v325
        %v327 = vmul.f32 %v322, %v326
        %v328 = vmul.f32 %v321, %v327
        %vm329 = vcmp.eq.f32.partialorder %v321, inf
        %v330 = vsel %vm329, %v321, %v328
        %vm331 = vcmp.eq.f32.partialorder %v321, 0.0
        %v332 = vand.u32 %v321, 2147483648
        %v333 = vsel %vm331, %v332, %v330
        %v334 = vmul.f32 %v333, %v320
        %vm335 = vcmp.lt.f32.partialorder %v304, 0.0
        %v336 = vsub.f32 3.1415927, %v334
        %v337 = vsel %vm335, %v336, %v334
        %vm338 = vcmask 1041408
        %v339 = vsel %vm338, %v337, 0.0
        %v340 = vrot.slane %v339, 4
        %v341 = vadd.f32 %v339, %v340
        %v342 = vrot.slane %v341, 2
        %v343 = vadd.f32 %v341, %v342
        %v344 = vrot.slane %v343, 1
        %v345 = vadd.f32 %v343, %v344
        %v346 = vlaneseq
        %v347 = vshrl.u32 %v346, 7
        %vm348 = vcmp.eq.s32.totalorder %v347, 0
        %v349 = vsel %vm348, %v345, 0.0
        %350 = vst [vmem:[%s225] sm:$0xff] %v349
        %s351 = sand.u32 %s100, 1
        %s352 = scalar_lea.sflag [#allocation4], %s351
        %s353 = sand.u32 %s100, 1
        %s354 = smul.addr %s353, 8
        %s355 = scalar_lea.vmem [#allocation7], %s354
        // Predicated region
        $region37: #{tpu_custom_call.1} parent=27 // pred_check
          %p356 = pneg %p110
        $region38: #{tpu_custom_call.1} parent=27 // pred_check_branch
          %358 = sbr.rel (%p356) target = $region40
        $region39: #{tpu_custom_call.1} parent=27 // pred_region
          %360 = vsyncadd %s352, 0
          %s361 = sadd.s32 %s27, %s26
          %s362 = smul.addr %s361, 8
          %s363 = scalar_lea.hbm %s2, %s362
          %s365 = sshll.u32 %s355, 4
          %s366 = int_to_ptr.vmem [resolvable:$true] %s365
          %s367 = sshll.u32 %s363, 4
          %s368 = int_to_ptr.hbm [resolvable:$true] %s367
          %370 = dma.vmem_to_hbm [thread:$0]  %s366, 128, %s368, %s352
        $region40: #{tpu_custom_call.1} parent=27 // pred_fallthru
          _
      $region28: #{tpu_custom_call.1} parent=5 // pred_fallthru
        _
      %p371 = scmp.le.s32.totalorder 2, %s17
      // Predicated region
      $region41: #{tpu_custom_call.1} parent=5 // pred_check
        %p372 = pneg %p371
      $region42: #{tpu_custom_call.1} parent=5 // pred_check_branch
        %374 = sbr.rel (%p372) target = $region44
      $region43: #{tpu_custom_call.1} parent=5 // pred_region
        %s375 = ssub.s32 %s17, 2
        // Predicated region
        $region45: #{tpu_custom_call.1} parent=43 // pred_check
          %p376 = pneg %p116
        $region46: #{tpu_custom_call.1} parent=43 // pred_check_branch
          %378 = sbr.rel (%p376) target = $region48
        $region47: #{tpu_custom_call.1} parent=43 // pred_region
          %s379 = sand.u32 %s101, 1
          %s380 = scalar_lea.sflag [#allocation4], %s379
          %s381 = sand.u32 %s101, 1
          %s382 = smul.addr %s381, 8
          %s383 = scalar_lea.vmem [#allocation7], %s382
          %385 = dma.done %s380, 128
        $region48: #{tpu_custom_call.1} parent=43 // pred_fallthru
          _
      $region44: #{tpu_custom_call.1} parent=5 // pred_fallthru
        _
    $region6: #{tpu_custom_call.1} parent=1 // loop_footer
      %s21 = sadd.s32 1, %s17
    $region7: #{tpu_custom_call.1} parent=1 // loop_footer_branch
      %16 = sbr.rel target = $region3
    $region8: #{tpu_custom_call.1} parent=1 // loop_exit
      _
    %386 = vsyncpa [#allocation3], 1
    %s387 = scalar_lea.sflag [#allocation3], 1
    %388 = vsyncpa %s387, 1
    %389 = vsyncpa [#allocation6], 1
    %s390 = scalar_lea.sflag [#allocation6], 1
    %391 = vsyncpa %s390, 1
    %392 = vsyncpa [#allocation4], 1
    %s393 = scalar_lea.sflag [#allocation4], 1
    %394 = vsyncpa %s393, 1

</llo_original>
